<compile_context>
chip_gen: v7x
topology: tpu7x:2x2x1
jax: 0.10.0
libtpu: 0.0.40
codegen_flags: <defaults>
</compile_context>

<pallas_src>
import jax
import jax.numpy as jnp
from jax.experimental import pallas as pl
from jax.experimental.pallas import tpu as pltpu

_LANE = 128
_SUBLANE = 8


def _round_up(n, m):
    return ((n + m - 1) // m) * m


def _embedding_kernel(x_ref, w_ref, b_ref, o_ref):
    # x_ref: [TILE_M, c_in]     (streamed per grid step)
    # w_ref: [c_in, d_model]    (VMEM-resident, already transposed in wrapper)
    # b_ref: [1, d_model]       (VMEM-resident)
    # o_ref: [TILE_M, d_model]
    y = jnp.dot(x_ref[...], w_ref[...], preferred_element_type=jnp.float32)
    o_ref[...] = (y + b_ref[...]).astype(o_ref.dtype)


def data_embedding(x, weight, bias, *, max_tile_m=2048, out_dtype=None):
    """value_proj(x) with eval-mode dropout (identity).

    x:      [B, T, c_in]      float32
    weight: [d_model, c_in]   (PyTorch nn.Linear layout)
    bias:   [d_model]
    returns [B, T, d_model]   (dtype = out_dtype or x.dtype)
    """
    B, T, c_in = x.shape
    d_model = weight.shape[0]
    M = B * T
    out_dtype = x.dtype if out_dtype is None else out_dtype

    # Canonical [M,K]@[K,N] form for the MXU: transpose the (tiny) weight once.
    w_t = weight.T                       # [c_in, d_model]
    b2 = bias.reshape(1, d_model)        # [1, d_model]
    x2d = x.reshape(M, c_in)             # contiguous reshape, no copy

    # ---- VMEM-aware TILE_M derivation -------------------------------------
    # The x tile occupies round_up(c_in,128) lanes in VMEM, the output tile
    # round_up(d_model,128) lanes; both are double-buffered by the pipeline.
    # The resident weight/bias blocks are also (conservatively) counted as
    # double-buffered even though their index_map is constant.
    c_vmem = _round_up(c_in, _LANE)
    d_vmem = _round_up(d_model, _LANE)
    bytes_per_row = 2 * 4 * (c_vmem + d_vmem)                    # 2 bufs, f32
    resident_bytes = 2 * 4 * (_round_up(c_in, _SUBLANE) * d_vmem  # weight x2
                              + _SUBLANE * d_vmem)                # bias   x2
    budget_bytes = 24 * 1024 * 1024
    avail = max(budget_bytes - resident_bytes, _SUBLANE * bytes_per_row)
    tile_m = min(max_tile_m, avail // bytes_per_row)
    tile_m = max(_SUBLANE, (tile_m // _SUBLANE) * _SUBLANE)
    tile_m = min(tile_m, _round_up(M, _SUBLANE))   # don't over-tile tiny inputs

    grid = (pl.cdiv(M, tile_m),)   # ragged last block handled by Pallas masking

    out2d = pl.pallas_call(
        _embedding_kernel,
        out_shape=jax.ShapeDtypeStruct((M, d_model), out_dtype),
        grid_spec=pltpu.PrefetchScalarGridSpec(
            num_scalar_prefetch=0,
            grid=grid,
            in_specs=[
                pl.BlockSpec((tile_m, c_in), lambda i: (i, 0)),     # streamed rows
                pl.BlockSpec((c_in, d_model), lambda i: (0, 0)),    # resident weight
                pl.BlockSpec((1, d_model), lambda i: (0, 0)),       # resident bias
            ],
            out_specs=pl.BlockSpec((tile_m, d_model), lambda i: (i, 0)),
        ),
        compiler_params=pltpu.CompilerParams(
            dimension_semantics=("parallel",),          # v7x 2-TC sharding
            vmem_limit_bytes=32 * 1024 * 1024,
        ),
    )(x2d, w_t, b2)

    return out2d.reshape(B, T, d_model)


if __name__ == "__main__":
    # Small shapes consistent with the module's forward:
    #   x: [batch=2, seq=8, c_in=4]  ->  out: [2, 8, d_model=32]
    B, T, c_in, d_model = 2, 8, 4, 32

    key = jax.random.PRNGKey(0)
    kx, kw, kb = jax.random.split(key, 3)

    x = jax.random.normal(kx, (B, T, c_in), dtype=jnp.float32)
    # Deterministic Linear parameters (PyTorch layout: weight [d_model, c_in])
    weight = jax.random.normal(kw, (d_model, c_in), dtype=jnp.float32) * 0.1
    bias = jax.random.normal(kb, (d_model,), dtype=jnp.float32) * 0.1

    out = data_embedding(x, weight, bias)
    out = jax.block_until_ready(out)

    # Reference check against plain JAX (eval-mode dropout == identity).
    ref = x @ weight.T + bias
    assert out.shape == (B, T, d_model)
    assert jnp.allclose(out, ref, atol=1e-5, rtol=1e-5)

    print("KERNEL_OK")
</pallas_src>

<mosaic_0001>
module attributes {stable_mosaic.version = 11 : i64} {
  func.func @_embedding_kernel(%arg0: i32, %arg1: memref<16x4xf32, #tpu.memory_space<vmem>>, %arg2: memref<4x32xf32, #tpu.memory_space<vmem>>, %arg3: memref<1x32xf32, #tpu.memory_space<vmem>>, %arg4: memref<16x32xf32, #tpu.memory_space<vmem>>) attributes {dimension_semantics = [#tpu.dimension_semantics<parallel>], iteration_bounds = array<i64: 1>, scalar_prefetch = 0 : i64, scratch_operands = 0 : i64, tpu.core_type = #tpu.core_type<tc>, window_params = [{transform_indices = @transform_0, window_bounds = array<i64: 16, 4>}, {pipeline_mode = #tpu.pipeline_mode<synchronous>, transform_indices = @transform_1, window_bounds = array<i64: 4, 32>}, {pipeline_mode = #tpu.pipeline_mode<synchronous>, transform_indices = @transform_2, window_bounds = array<i64: 1, 32>}, {transform_indices = @transform_3, window_bounds = array<i64: 16, 32>}]} {
    %c0 = arith.constant 0 : index
    %c0_0 = arith.constant 0 : index
    %0 = vector.load %arg1[%c0, %c0_0] : memref<16x4xf32, #tpu.memory_space<vmem>>, vector<16x4xf32>
    %c0_1 = arith.constant 0 : index
    %c0_2 = arith.constant 0 : index
    %1 = vector.load %arg2[%c0_1, %c0_2] : memref<4x32xf32, #tpu.memory_space<vmem>>, vector<4x32xf32>
    %cst = arith.constant dense<0.000000e+00> : vector<16x32xf32>
    %2 = tpu.matmul %0, %1, %cst {dimension_numbers = #tpu.dot_dimension_numbers<[1], [0], [0], [1], [0, 0, 1, 1], [], []>} : vector<16x4xf32>, vector<4x32xf32>, vector<16x32xf32> -> vector<16x32xf32>
    %c0_3 = arith.constant 0 : index
    %c0_4 = arith.constant 0 : index
    %3 = vector.load %arg3[%c0_3, %c0_4] : memref<1x32xf32, #tpu.memory_space<vmem>>, vector<1x32xf32>
    %4 = vector.broadcast %3 : vector<1x32xf32> to vector<16x32xf32>
    %5 = arith.addf %2, %4 : vector<16x32xf32>
    %c0_5 = arith.constant 0 : index
    %c0_6 = arith.constant 0 : index
    %6 = vector.load %arg4[%c0_5, %c0_6] : memref<16x32xf32, #tpu.memory_space<vmem>>, vector<16x32xf32>
    tpu.vector_store %arg4[%c0_5, %c0_6], %5 {strides = array<i32>} : memref<16x32xf32, #tpu.memory_space<vmem>>, vector<16x32xf32>,
    return
  }
  func.func @transform_0(%arg0: i32) -> (i32, i32) {
    %c0_i32 = arith.constant 0 : i32
    %c0_i32_0 = arith.constant 0 : i32
    return %arg0, %c0_i32 : i32, i32
  }
  func.func @transform_1(%arg0: i32) -> (i32, i32) {
    %c0_i32 = arith.constant 0 : i32
    %c0_i32_0 = arith.constant 0 : i32
    %c0_i32_1 = arith.constant 0 : i32
    return %c0_i32, %c0_i32_0 : i32, i32
  }
  func.func @transform_2(%arg0: i32) -> (i32, i32) {
    %c0_i32 = arith.constant 0 : i32
    %c0_i32_0 = arith.constant 0 : i32
    %c0_i32_1 = arith.constant 0 : i32
    return %c0_i32, %c0_i32_0 : i32, i32
  }
  func.func @transform_3(%arg0: i32) -> (i32, i32) {
    %c0_i32 = arith.constant 0 : i32
    %c0_i32_0 = arith.constant 0 : i32
    return %arg0, %c0_i32 : i32, i32
  }
}

</mosaic_0001>

<llo_original>
// kernel: tpu_custom_call.1
$region0: #{tpu_custom_call.1}
  #allocation0 [shape = 'u32[]', space=smem, size = 0x4, offset = 0x4, fixed_abs, tag = 'smem constant byte address 0x4 - core index']
  #allocation1 [shape = 'u32[144,128]{1,0:T(1,128)}', space=vmem, size = 0x12000, scoped, tag = 'internal scratch']
  %s0 = inlined_call_operand.vmem [shape: f32[16,4], index: 0, kind: input, shape index: {}]
  %s1 = inlined_call_operand.vmem [shape: f32[4,32], index: 1, kind: input, shape index: {}]
  %s2 = inlined_call_operand.vmem [shape: f32[1,32], index: 2, kind: input, shape index: {}]
  %s3 = inlined_call_operand.hbm [shape: f32[16,32], index: 3, kind: output, shape index: {}]
  %s4 = sld [smem:[#allocation0]]
  $region22: #{tpu_custom_call.1} parent=0
    _
  %s6 = ssub.s32 1, %s4
  %s7 = scalar_select 0, %s6, %s4
  $region1: #{tpu_custom_call.1} parent=0
    #allocation2 [shape = 'u8[8192]{0}', space=vmem, size = 0x2000, scoped, tag = 'output window, operand 0, single buffered']
    #allocation3 [shape = 's32[1]{0}', space=sflag, size = 0x4, scoped, tag = 'scoped memory for tpu_custom_call.1']
    %8 = vsyncpa [#allocation3], 0
    // Predicated region
    $region2: #{tpu_custom_call.1} parent=1 // pred_check
      _
    $region3: #{tpu_custom_call.1} parent=1 // pred_check_branch
      %10 = sbr.rel (0) target = $region5
    $region4: #{tpu_custom_call.1} parent=1 // pred_region
      _
    $region5: #{tpu_custom_call.1} parent=1 // pred_fallthru
      _
    // Predicated region
    $region6: #{tpu_custom_call.1} parent=1 // pred_check
      _
    $region7: #{tpu_custom_call.1} parent=1 // pred_check_branch
      %12 = sbr.rel (0) target = $region9
    $region8: #{tpu_custom_call.1} parent=1 // pred_region
      _
    $region9: #{tpu_custom_call.1} parent=1 // pred_fallthru
      _
    // Predicated region
    $region10: #{tpu_custom_call.1} parent=1 // pred_check
      _
    $region11: #{tpu_custom_call.1} parent=1 // pred_check_branch
      %14 = sbr.rel (0) target = $region13
    $region12: #{tpu_custom_call.1} parent=1 // pred_region
      _
    $region13: #{tpu_custom_call.1} parent=1 // pred_fallthru
      _
    %v15 = vld [vmem:[%s0] sm:$0xff]
    %v16 = vld [vmem:[%s0 + $0x8] sm:$0xff]
    %v17 = vld [vmem:[%s1] sm:$0xf]
    %v18 = vld [vmem:[%s2] sm:$0x1]
    %v20 = vlaneseq
    %v21 = vshrl.u32 %v20, 7
    %v22 = vsub.s32 0, %v21
    %v23 = vrot.slane %v18, %v22
    %vm25 = vcmask 31744
    %v27 = vsel %vm25, %v15, 0
    %v30 = vsel %vm25, %v16, 0
    %vm32 = vcmask 1043456
    %v34 = vsel %vm32, %v17, 0
    %36 = vmatprep.subr.mxu0 0.0
    %37 = vmatpush1.msra.mxu0 %v34
    %38 = vmatprep.subr.mxu0 0.0
    %39 = vmatpush1.msra.mxu0 0.0
    %40 = vmatprep.subr.mxu0 0.0
    %41 = vmatpush1.msra.mxu0 0.0
    %42 = vmatprep.subr.mxu0 0.0
    %43 = vmatpush1.msra.mxu0 0.0
    %44 = vmatprep.subr.mxu0 0.0
    %45 = vmatpush1.msra.mxu0 0.0
    %46 = vmatprep.subr.mxu0 0.0
    %47 = vmatpush1.msra.mxu0 0.0
    %48 = vmatprep.subr.mxu0 0.0
    %49 = vmatpush1.msra.mxu0 0.0
    %50 = vmatprep.subr.mxu0 0.0
    %51 = vmatpush1.msra.mxu0 0.0
    %52 = vmatprep.subr.mxu0 0.0
    %53 = vmatpush1.msra.mxu0 0.0
    %54 = vmatprep.subr.mxu0 0.0
    %55 = vmatpush1.msra.mxu0 0.0
    %56 = vmatprep.subr.mxu0 0.0
    %57 = vmatpush1.msra.mxu0 0.0
    %58 = vmatprep.subr.mxu0 0.0
    %59 = vmatpush1.msra.mxu0 0.0
    %60 = vmatprep.subr.mxu0 0.0
    %61 = vmatpush1.msra.mxu0 0.0
    %62 = vmatprep.subr.mxu0 0.0
    %63 = vmatpush1.msra.mxu0 0.0
    %64 = vmatprep.subr.mxu0 0.0
    %65 = vmatpush1.msra.mxu0 0.0
    %66 = vmatprep.subr.mxu0 0.0
    %67 = vmatpush1.msra.mxu0 0.0
    %68 = vmatprep.subr.mxu0 0.0
    %69 = vmatpush1.msra.mxu0 0.0
    %70 = vmatprep.subr.mxu0 0.0
    %71 = vmatpush1.msra.mxu0 0.0
    %72 = vmatprep.subr.mxu0 0.0
    %73 = vmatpush1.msra.mxu0 0.0
    %74 = vmatprep.subr.mxu0 0.0
    %75 = vmatpush1.msra.mxu0 0.0
    %76 = vmatprep.subr.mxu0 0.0
    %77 = vmatpush1.msra.mxu0 0.0
    %78 = vmatprep.subr.mxu0 0.0
    %79 = vmatpush1.msra.mxu0 0.0
    %80 = vmatprep.subr.mxu0 0.0
    %81 = vmatpush1.msra.mxu0 0.0
    %82 = vmatprep.subr.mxu0 0.0
    %83 = vmatpush1.msra.mxu0 0.0
    %84 = vmatprep.subr.mxu0 0.0
    %85 = vmatpush1.msra.mxu0 0.0
    %86 = vmatprep.subr.mxu0 0.0
    %87 = vmatpush1.msra.mxu0 0.0
    %88 = vmatprep.subr.mxu0 0.0
    %89 = vmatpush1.msra.mxu0 0.0
    %90 = vmatprep.subr.mxu0 0.0
    %91 = vmatpush1.msra.mxu0 0.0
    %92 = vmatprep.subr.mxu0 0.0
    %93 = vmatpush1.msra.mxu0 0.0
    %94 = vmatprep.subr.mxu0 0.0
    %95 = vmatpush1.msra.mxu0 0.0
    %96 = vmatprep.subr.mxu0 0.0
    %97 = vmatpush1.msra.mxu0 0.0
    %98 = vmatprep.subr.mxu0 0.0
    %99 = vmatpush1.msra.mxu0 0.0
    %100 = vmatprep.mubr.f32.mxu0 0.0
    %101 = vmatmul.mubr.f32.gmra.mrb[0].mxu0 %v27
    %v102 = vpop.f32.mrb[0].mxu0
    %v103 = vadd.f32 %v23, %v102
    %v104 = vpop.f32.mrb[0].mxu0
    %105 = vmatprep.mubr.f32.mxu0 0.0
    %106 = vmatmul.mubr.f32.gmra.mrb[0].mxu0 %v30
    %v107 = vpop.f32.mrb[0].mxu0
    %v108 = vadd.f32 %v23, %v107
    %v109 = vpop.f32.mrb[0].mxu0
    %110 = vdwg.mxu0
    %vm111 = vcmask 261120
    %112 = vst.msk [vmem:[#allocation2] sm:$0xff] %vm111, %v103
    %113 = vst.msk [vmem:[#allocation2 + $0x8] sm:$0xff] %vm111, %v108
    // Predicated region
    $region14: #{tpu_custom_call.1} parent=1 // pred_check
      _
    $region15: #{tpu_custom_call.1} parent=1 // pred_check_branch
      %115 = sbr.rel (0) target = $region17
    $region16: #{tpu_custom_call.1} parent=1 // pred_region
      %s117 = ssub.s32 256, 256
      %118 = vsyncadd [#allocation3], %s117
      %s119 = sshll.u32 [#allocation2], 4
      %s120 = int_to_ptr.vmem [resolvable:$true] %s119
      %125 = dma.vmem_to_hbm [thread:$0]  %s120, 256, %s3, [#allocation3], 128, 128, 8
    $region17: #{tpu_custom_call.1} parent=1 // pred_fallthru
      _
    // Predicated region
    $region18: #{tpu_custom_call.1} parent=1 // pred_check
      _
    $region19: #{tpu_custom_call.1} parent=1 // pred_check_branch
      %127 = sbr.rel (0) target = $region21
    $region20: #{tpu_custom_call.1} parent=1 // pred_region
      %128 = dma.done [#allocation3], 256
    $region21: #{tpu_custom_call.1} parent=1 // pred_fallthru
      _
    %129 = vsyncpa [#allocation3], 1

</llo_original>
